<compile_context>
chip_gen: v7x
topology: tpu7x:2x2x1
jax: 0.10.0
libtpu: 0.0.40
codegen_flags: <defaults>
</compile_context>

<pallas_src>
from functools import partial

import jax
import jax.numpy as jnp
from jax.experimental import pallas as pl
from jax.experimental.pallas import tpu as pltpu

_LANES = 128
_MAX_TILE_ROWS = 4096            # 4096 x 128 x 4B = 2 MiB f32 per block
_FUSED_BYTES = 2 * 1024 * 1024   # fused single-pass path if slab <= 2 MiB
_FUSED_RAGGED_ELEMS = 64 * 1024  # fused-path bound for non-128-divisible sizes
_VMEM_LIMIT = 32 * 1024 * 1024   # explicit scoped-VMEM headroom (safe on v5e/v6e/v7x)


def _round_up(v, m):
    return ((v + m - 1) // m) * m


def _fused_kernel(x_ref, o_ref, *, inv_count):
    """Whole-slab PowerNorm: one read, sum(x^2) -> rsqrt -> scale -> store."""
    x = x_ref[...].astype(jnp.float32)
    scale = jax.lax.rsqrt(2.0 * jnp.sum(x * x) * inv_count)
    o_ref[...] = (x * scale).astype(o_ref.dtype)


def _partial_sq_kernel(x_ref, psum_ref, *, valid_rows, needs_mask):
    """Per-tile, per-lane partial sums of squares (f32)."""
    x = x_ref[...].astype(jnp.float32)
    if needs_mask:
        # Last tile overhangs the array: zero out garbage rows before squaring.
        tile_rows = x_ref.shape[0]
        row = (pl.program_id(0) * tile_rows
               + jax.lax.broadcasted_iota(jnp.int32, x.shape, 0))
        x = jnp.where(row < valid_rows, x, 0.0)
    psum_ref[...] = jnp.sum(x * x, axis=0, keepdims=True)


def _scale_kernel(scale_ref, x_ref, o_ref):
    """y_tile = x_tile * scale (scale is an SMEM scalar)."""
    s = scale_ref[0]
    o_ref[...] = (x_ref[...].astype(jnp.float32) * s).astype(o_ref.dtype)


def _fused_powernorm(x2, n, out_dtype):
    itemsize = jnp.dtype(x2.dtype).itemsize
    return pl.pallas_call(
        partial(_fused_kernel, inv_count=1.0 / n),
        out_shape=jax.ShapeDtypeStruct(x2.shape, out_dtype),
        compiler_params=pltpu.CompilerParams(vmem_limit_bytes=_VMEM_LIMIT),
        cost_estimate=pl.CostEstimate(
            flops=3 * n, transcendentals=1,
            bytes_accessed=2 * n * itemsize),
    )(x2)


def _tiled_powernorm(x2, n, out_dtype):
    n_rows = x2.shape[0]
    itemsize = jnp.dtype(x2.dtype).itemsize
    # ~2 MiB f32 blocks; keep at least 2 tiles so the "parallel" grid axis can
    # shard across both TensorCores on v7x.
    tile_rows = min(_MAX_TILE_ROWS, _round_up(pl.cdiv(n_rows, 2), 8))
    n_tiles = pl.cdiv(n_rows, tile_rows)
    needs_mask = (n_rows % tile_rows) != 0

    # Phase 1: per-tile, per-lane partial sums of squares (HBM read pass).
    partials = pl.pallas_call(
        partial(_partial_sq_kernel, valid_rows=n_rows, needs_mask=needs_mask),
        out_shape=jax.ShapeDtypeStruct((n_tiles, _LANES), jnp.float32),
        grid=(n_tiles,),
        in_specs=[pl.BlockSpec((tile_rows, _LANES), lambda i: (i, 0))],
        out_specs=pl.BlockSpec((1, _LANES), lambda i: (i, 0)),
        compiler_params=pltpu.CompilerParams(
            dimension_semantics=("parallel",),
            vmem_limit_bytes=_VMEM_LIMIT),
        cost_estimate=pl.CostEstimate(
            flops=2 * n_rows * _LANES, transcendentals=0,
            bytes_accessed=n_rows * _LANES * itemsize + n_tiles * _LANES * 4),
    )(x2)

    # Tiny combine (KB-sized) + rsqrt; the mean uses the TRUE element count n.
    scale = jax.lax.rsqrt(2.0 * jnp.sum(partials) / n)
    scale = jnp.reshape(scale, (1,)).astype(jnp.float32)

    # Phase 2: streaming rescale; scale lives in SMEM (no per-step VMEM block).
    out2 = pl.pallas_call(
        _scale_kernel,
        out_shape=jax.ShapeDtypeStruct(x2.shape, out_dtype),
        grid=(n_tiles,),
        in_specs=[pl.BlockSpec(memory_space=pltpu.MemorySpace.SMEM),
                  pl.BlockSpec((tile_rows, _LANES), lambda i: (i, 0))],
        out_specs=pl.BlockSpec((tile_rows, _LANES), lambda i: (i, 0)),
        compiler_params=pltpu.CompilerParams(
            dimension_semantics=("parallel",),
            vmem_limit_bytes=_VMEM_LIMIT),
        cost_estimate=pl.CostEstimate(
            flops=n_rows * _LANES, transcendentals=0,
            bytes_accessed=2 * n_rows * _LANES * itemsize),
    )(scale, x2)
    return out2


def powernorm(x):
    """PowerNorm forward pass: x / sqrt(2 * mean(x**2)) over all elements."""
    orig_shape = x.shape
    orig_dtype = x.dtype
    n = x.size
    itemsize = jnp.dtype(orig_dtype).itemsize
    flat = x.reshape(-1)

    if n % _LANES == 0:
        # Lane-dense [rows, 128] view with zero padding / slicing.
        x2 = flat.reshape(n // _LANES, _LANES)
        if n * itemsize <= _FUSED_BYTES:
            out2 = _fused_powernorm(x2, n, orig_dtype)
        else:
            out2 = _tiled_powernorm(x2, n, orig_dtype)
        return out2.reshape(orig_shape)

    if n <= _FUSED_RAGGED_ELEMS:
        # Non-128-divisible but small: single full-block kernel, no pad/slice.
        x2 = flat.reshape(1, n)
        return _fused_powernorm(x2, n, orig_dtype).reshape(orig_shape)

    # Rare fallback: large and not a multiple of 128.  Pad only to the next
    # lane multiple (zeros don't bias sum(x^2); the mean still divides by the
    # true n) and slice back at the end.
    pad = (-n) % _LANES
    flat = jnp.pad(flat, (0, pad))
    x2 = flat.reshape(-1, _LANES)
    out2 = _tiled_powernorm(x2, n, orig_dtype)
    return out2.reshape(-1)[:n].reshape(orig_shape)


if __name__ == "__main__":
    key = jax.random.PRNGKey(0)

    # Small NCHW input (fused lane-dense single-pass path).
    x = jax.random.normal(key, (2, 4, 16, 16), dtype=jnp.float32)
    y = powernorm(x)
    jax.block_until_ready(y)
    y_ref = x / jnp.sqrt(2.0 * jnp.mean(x ** 2))
    assert jnp.allclose(y, y_ref, atol=1e-5, rtol=1e-5)

    # Non-128-divisible shape (fused ragged path, no pad/slice).
    x_odd = jax.random.normal(jax.random.PRNGKey(1), (3, 5, 7, 11),
                              dtype=jnp.float32)
    y_odd = powernorm(x_odd)
    jax.block_until_ready(y_odd)
    y_odd_ref = x_odd / jnp.sqrt(2.0 * jnp.mean(x_odd ** 2))
    assert jnp.allclose(y_odd, y_odd_ref, atol=1e-5, rtol=1e-5)

    # Larger input exercising the two-pass tiled path incl. a ragged last tile
    # (grid overhang + in-kernel mask, "parallel" grid axes).
    x_big = jax.random.normal(jax.random.PRNGKey(2), (4100, 128),
                              dtype=jnp.float32)
    y_big = powernorm(x_big)
    jax.block_until_ready(y_big)
    y_big_ref = x_big / jnp.sqrt(2.0 * jnp.mean(x_big ** 2))
    assert jnp.allclose(y_big, y_big_ref, atol=1e-5, rtol=1e-5)

    print("KERNEL_OK")
</pallas_src>

<mosaic_0001>
module attributes {stable_mosaic.version = 11 : i64} {
  func.func @_fused_kernel(%arg0: memref<16x128xf32, #tpu.memory_space<vmem>>, %arg1: memref<16x128xf32, #tpu.memory_space<vmem>>) attributes {dimension_semantics = [], scalar_prefetch = 0 : i64, scratch_operands = 0 : i64, tpu.core_type = #tpu.core_type<tc>} {
    %c0 = arith.constant 0 : index
    %c0_0 = arith.constant 0 : index
    %0 = vector.load %arg0[%c0, %c0_0] : memref<16x128xf32, #tpu.memory_space<vmem>>, vector<16x128xf32>
    %1 = arith.mulf %0, %0 : vector<16x128xf32>
    %2 = vector.shape_cast %1 : vector<16x128xf32> to vector<1x16x128xf32>
    %cst = arith.constant dense<0.000000e+00> : vector<1xf32>
    %3 = vector.multi_reduction <add>, %2, %cst [1, 2] : vector<1x16x128xf32> to vector<1xf32>
    %4 = vector.shape_cast %3 : vector<1xf32> to vector<1x1x1xf32>
    %5 = vector.extract %4[0, 0, 0] : f32 from vector<1x1x1xf32>
    %cst_1 = arith.constant 2.000000e+00 : f32
    %6 = arith.mulf %cst_1, %5 : f32
    %cst_2 = arith.constant 4.8828125E-4 : f32
    %7 = arith.mulf %6, %cst_2 : f32
    %8 = math.rsqrt %7 : f32
    %9 = vector.broadcast %8 : f32 to vector<16x128xf32>
    %10 = arith.mulf %0, %9 : vector<16x128xf32>
    %c0_3 = arith.constant 0 : index
    %c0_4 = arith.constant 0 : index
    %11 = vector.load %arg1[%c0_3, %c0_4] : memref<16x128xf32, #tpu.memory_space<vmem>>, vector<16x128xf32>
    tpu.vector_store %arg1[%c0_3, %c0_4], %10 {strides = array<i32>} : memref<16x128xf32, #tpu.memory_space<vmem>>, vector<16x128xf32>,
    return
  }
}

</mosaic_0001>

<llo_original>
// kernel: tpu_custom_call.1
$region0: #{tpu_custom_call.1}
  #allocation0 [shape = 'u32[]', space=smem, size = 0x4, offset = 0x4, fixed_abs, tag = 'smem constant byte address 0x4 - core index']
  #allocation1 [shape = 'u32[144,128]{1,0:T(1,128)}', space=vmem, size = 0x12000, scoped, tag = 'internal scratch']
  %s0 = inlined_call_operand.hbm [shape: f32[16,128], index: 0, kind: input, shape index: {}]
  %s1 = inlined_call_operand.hbm [shape: f32[16,128], index: 1, kind: output, shape index: {}]
  %s2 = sld [smem:[#allocation0]]
  $region18: #{tpu_custom_call.1} parent=0
    _
  %s4 = ssub.s32 1, %s2
  %s5 = scalar_select 0, %s4, %s2
  $region1: #{tpu_custom_call.1} parent=0
    #allocation2 [shape = 'u8[8192]{0}', space=vmem, size = 0x2000, scoped, tag = 'input window, operand 0, single buffered']
    #allocation3 [shape = 's32[1]{0}', space=sflag, size = 0x4, scoped, tag = 'scoped memory for tpu_custom_call.1']
    #allocation4 [shape = 's32[1]{0}', space=sflag, size = 0x4, scoped, tag = 'scoped memory for tpu_custom_call.1']
    #allocation5 [shape = 'u8[8192]{0}', space=vmem, size = 0x2000, scoped, tag = 'output window, operand 0, single buffered']
    %6 = vsyncpa [#allocation3], 0
    %7 = vsyncpa [#allocation4], 0
    // Predicated region
    $region2: #{tpu_custom_call.1} parent=1 // pred_check
      _
    $region3: #{tpu_custom_call.1} parent=1 // pred_check_branch
      %9 = sbr.rel (0) target = $region5
    $region4: #{tpu_custom_call.1} parent=1 // pred_region
      %s11 = ssub.s32 256, 256
      %12 = vsyncadd [#allocation3], %s11
      %s13 = sshll.u32 [#allocation2], 4
      %s14 = int_to_ptr.vmem [resolvable:$true] %s13
      %19 = dma.hbm_to_vmem [thread:$0]  %s0, 256, %s14, [#allocation3], 128, 128, 8
    $region5: #{tpu_custom_call.1} parent=1 // pred_fallthru
      _
    // Predicated region
    $region6: #{tpu_custom_call.1} parent=1 // pred_check
      _
    $region7: #{tpu_custom_call.1} parent=1 // pred_check_branch
      %21 = sbr.rel (0) target = $region9
    $region8: #{tpu_custom_call.1} parent=1 // pred_region
      %22 = dma.done [#allocation3], 256
    $region9: #{tpu_custom_call.1} parent=1 // pred_fallthru
      _
    %v23 = vld [vmem:[#allocation2] sm:$0xff]
    %v24 = vld [vmem:[#allocation2 + $0x8] sm:$0xff]
    %v25 = vmul.f32 %v23, %v23
    %v26 = vmul.f32 %v24, %v24
    %v27 = vadd.f32 %v25, %v26
    %28 = vadd.xlane.f32.xlu0 %v27
    %v29 = vpop.xlane.xlu0 %28
    %v30 = vrot.slane %v29, 4
    %v31 = vadd.f32 %v29, %v30
    %v32 = vrot.slane %v31, 2
    %v33 = vadd.f32 %v31, %v32
    %v34 = vrot.slane %v33, 1
    %v35 = vadd.f32 %v33, %v34
    %s36 = vtos %v35
    %s37 = smul.f32 %s36, 2.0
    %s38 = smul.f32 %s37, 0.00048828125
    %v39 = vstv %s38
    %v40 = vrsqrt.pop %v39
    %s41 = vtos %v40
    %v42 = vstv %s41
    %v43 = vmul.f32 %v23, %v42
    %v44 = vmul.f32 %v24, %v42
    %45 = vst [vmem:[#allocation5] sm:$0xff] %v43
    %46 = vst [vmem:[#allocation5 + $0x8] sm:$0xff] %v44
    // Predicated region
    $region10: #{tpu_custom_call.1} parent=1 // pred_check
      _
    $region11: #{tpu_custom_call.1} parent=1 // pred_check_branch
      %48 = sbr.rel (0) target = $region13
    $region12: #{tpu_custom_call.1} parent=1 // pred_region
      %s50 = ssub.s32 256, 256
      %51 = vsyncadd [#allocation4], %s50
      %s52 = sshll.u32 [#allocation5], 4
      %s53 = int_to_ptr.vmem [resolvable:$true] %s52
      %58 = dma.vmem_to_hbm [thread:$0]  %s53, 256, %s1, [#allocation4], 128, 128, 8
    $region13: #{tpu_custom_call.1} parent=1 // pred_fallthru
      _
    // Predicated region
    $region14: #{tpu_custom_call.1} parent=1 // pred_check
      _
    $region15: #{tpu_custom_call.1} parent=1 // pred_check_branch
      %60 = sbr.rel (0) target = $region17
    $region16: #{tpu_custom_call.1} parent=1 // pred_region
      %61 = dma.done [#allocation4], 256
    $region17: #{tpu_custom_call.1} parent=1 // pred_fallthru
      _
    %62 = vsyncpa [#allocation3], 1
    %63 = vsyncpa [#allocation4], 1

</llo_original>
